<compile_context>
chip_gen: v7x
topology: tpu7x:2x2x1
jax: 0.10.0
libtpu: 0.0.40
codegen_flags: <defaults>
</compile_context>

<pallas_src>
import jax
import jax.numpy as jnp
from jax.experimental import pallas as pl
from jax.experimental.pallas import tpu as pltpu

# True routes GELU through the tanh approximation (EUP path); False matches PyTorch's exact erf GELU.
GELU_TANH_APPROX = True


def _gelu(x):
    return jax.nn.gelu(x, approximate=GELU_TANH_APPROX)


def sgu_kernel(x_ref,                  # (Bt, S, D) f32 input (also the residual)
               w_ref, b_ref,           # (Bt, S, S) bf16 selected spatial weight, (Bt, S, 1) f32 bias
               wqkv_ref,               # (D, 3D) bf16 fused Wq|Wk|Wv
               wo_ref,                 # (D, D)  bf16 output projection
               consts_ref,             # (8, D)  f32: rows = gamma, beta, bq, bk, bv, bo, 0, 0
               out_ref):               # (Bt, S, D)
    x3 = x_ref[...]
    Bt, S, D = x3.shape
    R = Bt * S
    x = x3.reshape(R, D)                                     # flatten batch*seq for row-dense MXU work

    consts = consts_ref[...]
    gamma, beta = consts[0:1, :], consts[1:2, :]
    bq, bk, bv, bo = consts[2:3, :], consts[3:4, :], consts[4:5, :], consts[5:6, :]

    # ---- LayerNorm over d_ffn (f32, on the flattened (Bt*S, D) tile) ----
    mean = jnp.mean(x, axis=-1, keepdims=True)
    cen = x - mean
    var = jnp.mean(cen * cen, axis=-1, keepdims=True)
    xn = cen * jax.lax.rsqrt(var + 1e-5) * gamma + beta

    # ---- spatial projection: per-batch selected (S, S) weight, ONE batched matmul ----
    w = w_ref[...]                                           # (Bt, S, S) bf16
    xn3 = xn.reshape(Bt, S, D).astype(w.dtype)
    proj = jnp.einsum('bij,bjd->bid', w, xn3,
                      preferred_element_type=jnp.float32) + b_ref[...]
    gated = _gelu(proj + x3)                                 # (Bt, S, D) f32

    # ---- single-head self-attention on the residual x (fused QKV, f32 softmax) ----
    wqkv = wqkv_ref[...]                                     # (D, 3D) bf16
    cdt = wqkv.dtype
    xc = x.astype(cdt)
    qkv = jnp.dot(xc, wqkv, preferred_element_type=jnp.float32)   # (R, 3D) f32
    q = qkv[:, 0:D] + bq
    k = qkv[:, D:2 * D] + bk
    v = qkv[:, 2 * D:3 * D] + bv
    scale = jnp.float32(1.0 / (D ** 0.5))
    q3 = (q * scale).reshape(Bt, S, D).astype(cdt)
    k3 = k.reshape(Bt, S, D).astype(cdt)
    scores = jnp.einsum('bqd,bkd->bqk', q3, k3,
                        preferred_element_type=jnp.float32)       # (Bt, S, S)
    scores = scores - jnp.max(scores, axis=-1, keepdims=True)
    e = jnp.exp(scores)
    l = jnp.sum(e, axis=-1, keepdims=True)
    p = e * pl.reciprocal(l, approx=True)                         # divide on the EUP slot
    # p @ V kept in f32 (tiny S-deep contraction) -> tighter accuracy at negligible cost
    attn = jnp.einsum('bqk,bkd->bqd', p, v.reshape(Bt, S, D),
                      preferred_element_type=jnp.float32)          # (Bt, S, D) f32
    attn = jnp.dot(attn.reshape(R, D).astype(cdt), wo_ref[...],
                   preferred_element_type=jnp.float32) + bo        # (R, D)

    out_ref[...] = (gated + attn.reshape(Bt, S, D)).astype(out_ref.dtype)


def _pick_bt(B, S, max_rows=256, min_rows=128):
    """Largest divisor Bt of B with Bt*S <= max_rows; prefer >=2 grid steps (v7x megacore)
    when that still keeps >= min_rows per step."""
    divisors = [d for d in range(1, B + 1) if B % d == 0]
    cands = [d for d in divisors if d * S <= max_rows and d * S >= min_rows and B // d >= 2]
    if cands:
        return max(cands)
    cands = [d for d in divisors if d * S <= max_rows]
    return max(cands) if cands else 1


def _vmem_limit_bytes(Bt, S, D):
    f32, bf16 = 4, 2
    R = Bt * S
    # double-buffered streamed blocks: x, out, w_sel, b_sel
    stream = 2 * (2 * R * D * f32 + Bt * S * S * bf16 + Bt * S * f32)
    # double-buffered "constant" blocks: wqkv, wo, packed consts
    resident = 2 * (D * 3 * D * bf16 + D * D * bf16 + 8 * D * f32)
    # in-kernel temporaries (xn, qkv, q/k/v, scores, softmax, gated, attn, casts, ...)
    temps = 24 * R * D * f32 + 8 * Bt * S * S * f32
    est = stream + resident + temps
    # 4x headroom over the estimate; never request v7x's full 64 MiB physical VMEM.
    return int(min(48 * 2 ** 20, max(16 * 2 ** 20, 4 * est)))


def spatial_gating_unit(x, params, *, matmul_dtype=jnp.bfloat16):
    B, S, D = x.shape
    (gamma, beta, wc1, bc1, wc2, bc2, w1, b1, w2, b2,
     wq, bq, wk, bk, wv, bv, wo, bo) = params

    # --- routing hoisted out of the kernel (tiny; full f32 so the 0.5 threshold is bit-stable) ---
    hi = jax.lax.Precision.HIGHEST
    cls = x[:, 0, :]
    mean = jnp.mean(cls, axis=-1, keepdims=True)
    var = jnp.mean((cls - mean) ** 2, axis=-1, keepdims=True)
    cls_n = (cls - mean) * jax.lax.rsqrt(var + 1e-5) * gamma + beta
    h = jax.nn.gelu(jnp.dot(cls_n, wc1, precision=hi) + bc1, approximate=False)
    prob = jax.nn.sigmoid(jnp.dot(h, wc2, precision=hi) + bc2)           # (B, 1)
    # torch.round(p) for p in (0, 1) is exactly (p > 0.5)  (0.5 rounds to even -> 0)
    sel = (prob[:, 0] > 0.5).astype(jnp.int32)                           # (B,)
    # TODO(synk): `if self.evaluate: self.wr.writerow(cls_idx)` is host-side CSV logging; no kernel equivalent.

    # --- wrapper-side gather of the selected spatial projection (replaces scalar-prefetch routing) ---
    w_stack = jnp.stack([w1, w2])                                         # (2, S, S)
    b_stack = jnp.stack([b1, b2])                                         # (2, S, 1)
    w_sel = jnp.take(w_stack, sel, axis=0).astype(matmul_dtype)           # (B, S, S)
    b_sel = jnp.take(b_stack, sel, axis=0).astype(jnp.float32)            # (B, S, 1)

    # --- fused QKV weight + packed small constants ---
    wqkv = jnp.concatenate([wq, wk, wv], axis=1).astype(matmul_dtype)     # (D, 3D)
    wo_c = wo.astype(matmul_dtype)                                        # (D, D)
    rows = [gamma, beta, bq, bk, bv, bo]
    consts = jnp.concatenate(
        [jnp.reshape(r.astype(jnp.float32), (1, D)) for r in rows]
        + [jnp.zeros((2, D), jnp.float32)], axis=0)                        # (8, D)

    Bt = _pick_bt(B, S)
    nb = B // Bt

    grid_spec = pltpu.PrefetchScalarGridSpec(
        num_scalar_prefetch=0,
        grid=(nb,),
        in_specs=[
            pl.BlockSpec((Bt, S, D), lambda b: (b, 0, 0)),    # x (residual)
            pl.BlockSpec((Bt, S, S), lambda b: (b, 0, 0)),    # selected spatial weight
            pl.BlockSpec((Bt, S, 1), lambda b: (b, 0, 0)),    # selected spatial bias
            pl.BlockSpec((D, 3 * D), lambda b: (0, 0)),       # fused Wq|Wk|Wv
            pl.BlockSpec((D, D), lambda b: (0, 0)),           # Wo
            pl.BlockSpec((8, D), lambda b: (0, 0)),           # packed gamma/beta/bq/bk/bv/bo
        ],
        out_specs=pl.BlockSpec((Bt, S, D), lambda b: (b, 0, 0)),
    )

    return pl.pallas_call(
        sgu_kernel,
        out_shape=jax.ShapeDtypeStruct((B, S, D), x.dtype),
        grid_spec=grid_spec,
        compiler_params=pltpu.CompilerParams(
            dimension_semantics=("parallel",),
            vmem_limit_bytes=_vmem_limit_bytes(Bt, S, D)),
    )(x, w_sel, b_sel, wqkv, wo_c, consts)


def reference(x, params, *, matmul_dtype=jnp.float32, gated_gelu_approx=False):
    """Plain-JAX forward matching the PyTorch module.  `matmul_dtype` rounds the big-matmul
    operands (bf16 mirrors the kernel's numeric policy; f32 is exact PyTorch semantics).
    The p@V contraction stays f32, matching the kernel."""
    (gamma, beta, wc1, bc1, wc2, bc2, w1, b1, w2, b2,
     wq, bq, wk, bk, wv, bv, wo, bo) = params
    hi = jax.lax.Precision.HIGHEST
    f32 = jnp.float32

    def rnd(a):
        return a.astype(matmul_dtype).astype(f32)

    mean = x.mean(-1, keepdims=True)
    var = ((x - mean) ** 2).mean(-1, keepdims=True)
    xn = (x - mean) * jax.lax.rsqrt(var + 1e-5) * gamma + beta

    # routing (always full f32 + exact GELU, same as the hoisted wrapper path)
    cls = xn[:, 0, :]
    h = jax.nn.gelu(jnp.dot(cls, wc1, precision=hi) + bc1, approximate=False)
    prob = jax.nn.sigmoid(jnp.dot(h, wc2, precision=hi) + bc2)            # (B, 1)
    use_ii = (prob > 0.5)[:, :, None]                                     # (B, 1, 1)

    w = jnp.where(use_ii, w2[None], w1[None])
    b = jnp.where(use_ii, b2[None], b1[None])
    proj = jnp.einsum('bij,bjd->bid', rnd(w), rnd(xn), precision=hi) + b
    gated = jax.nn.gelu(proj + x, approximate=gated_gelu_approx)

    # single-head self-attention on the residual
    q = jnp.dot(rnd(x), rnd(wq), precision=hi) + bq
    k = jnp.dot(rnd(x), rnd(wk), precision=hi) + bk
    v = jnp.dot(rnd(x), rnd(wv), precision=hi) + bv
    scale = 1.0 / (x.shape[-1] ** 0.5)
    scores = jnp.einsum('bsd,btd->bst', rnd(q * scale), rnd(k), precision=hi)
    p = jax.nn.softmax(scores, axis=-1)
    attn = jnp.einsum('bst,btd->bsd', p, v, precision=hi)                 # f32, like the kernel
    attn = jnp.dot(rnd(attn), rnd(wo), precision=hi) + bo
    return gated + attn


if __name__ == "__main__":
    # Small but lane-dense shapes: seq_len S multiple of 8, d_ffn D multiple of 128.
    B, S, D = 2, 8, 128

    key = jax.random.PRNGKey(0)
    keys = jax.random.split(key, 13)
    x = jax.random.normal(keys[0], (B, S, D), jnp.float32)

    # LayerNorm(d_ffn)
    gamma = jnp.ones((1, D), jnp.float32)
    beta = jnp.zeros((1, D), jnp.float32)
    # spatial_cls: Linear(D, 10) -> GELU -> Linear(10, 1) -> Sigmoid
    wc1 = jax.random.normal(keys[1], (D, 10), jnp.float32) * 0.2
    bc1 = jnp.zeros((1, 10), jnp.float32)
    wc2 = jax.random.normal(keys[2], (10, 1), jnp.float32) * 0.3
    bc2 = jnp.zeros((1, 1), jnp.float32)
    # spatial_proj_i / _ii: Conv1d(seq, seq, 1) == (S, S) weight + (S,) bias
    w1 = jax.random.normal(keys[3], (S, S), jnp.float32) / jnp.sqrt(S)
    w2 = jax.random.normal(keys[4], (S, S), jnp.float32) / jnp.sqrt(S)
    b1 = jnp.full((S, 1), -1.0, jnp.float32)       # nn.init.constant_(bias, -1.0)
    b2 = jnp.full((S, 1), 1.0, jnp.float32)        # nn.init.constant_(bias, +1.0)
    # attn_extention: MultiheadAttention(d_ffn, 1, batch_first=True) -- single head, right-mul layout
    s = 1.0 / jnp.sqrt(D)
    wq = jax.random.normal(keys[5], (D, D), jnp.float32) * s
    wk = jax.random.normal(keys[6], (D, D), jnp.float32) * s
    wv = jax.random.normal(keys[7], (D, D), jnp.float32) * s
    wo = jax.random.normal(keys[8], (D, D), jnp.float32) * s
    bq = jax.random.normal(keys[9], (1, D), jnp.float32) * 0.05
    bk = jax.random.normal(keys[10], (1, D), jnp.float32) * 0.05
    bv = jax.random.normal(keys[11], (1, D), jnp.float32) * 0.05
    bo = jnp.zeros((1, D), jnp.float32)

    params = (gamma, beta, wc1, bc1, wc2, bc2, w1, b1, w2, b2,
              wq, bq, wk, bk, wv, bv, wo, bo)

    # --- case 1: tiny batch (single grid step, Bt = B = 2) ---
    out = spatial_gating_unit(x, params)
    jax.block_until_ready(out)
    assert out.shape == (B, S, D)

    ref_mirror = reference(x, params, matmul_dtype=jnp.bfloat16,
                           gated_gelu_approx=GELU_TANH_APPROX)    # kernel's numeric policy
    ref_exact = reference(x, params, matmul_dtype=jnp.float32,
                          gated_gelu_approx=False)                # full-f32 PyTorch semantics
    err_m = float(jnp.max(jnp.abs(out - ref_mirror)))
    err_e = float(jnp.max(jnp.abs(out - ref_exact)))
    assert jnp.allclose(out, ref_mirror, atol=2e-2, rtol=2e-2), (
        f"kernel vs bf16-operand reference mismatch, max abs err {err_m}")
    assert jnp.allclose(out, ref_exact, atol=1.5e-1, rtol=1.5e-1), (
        f"kernel vs f32 reference mismatch, max abs err {err_e}")

    # --- case 2: larger batch exercising the batch-blocked multi-step grid (Bt=16, 2 steps) ---
    B2 = 32
    x2 = jax.random.normal(keys[12], (B2, S, D), jnp.float32)
    out2 = spatial_gating_unit(x2, params)
    jax.block_until_ready(out2)
    assert out2.shape == (B2, S, D)
    ref2 = reference(x2, params, matmul_dtype=jnp.bfloat16,
                     gated_gelu_approx=GELU_TANH_APPROX)
    err2 = float(jnp.max(jnp.abs(out2 - ref2)))
    assert jnp.allclose(out2, ref2, atol=2e-2, rtol=2e-2), (
        f"batched kernel vs bf16-operand reference mismatch, max abs err {err2}")

    print("KERNEL_OK")
</pallas_src>

<mosaic_0001>
module attributes {stable_mosaic.version = 11 : i64} {
  func.func @sgu_kernel(%arg0: i32, %arg1: memref<2x8x128xf32, #tpu.memory_space<vmem>>, %arg2: memref<2x8x8xbf16, #tpu.memory_space<vmem>>, %arg3: memref<2x8x1xf32, #tpu.memory_space<vmem>>, %arg4: memref<128x384xbf16, #tpu.memory_space<vmem>>, %arg5: memref<128x128xbf16, #tpu.memory_space<vmem>>, %arg6: memref<8x128xf32, #tpu.memory_space<vmem>>, %arg7: memref<2x8x128xf32, #tpu.memory_space<vmem>>) attributes {dimension_semantics = [#tpu.dimension_semantics<parallel>], iteration_bounds = array<i64: 1>, scalar_prefetch = 0 : i64, scratch_operands = 0 : i64, tpu.core_type = #tpu.core_type<tc>, window_params = [{transform_indices = @transform_0, window_bounds = array<i64: 2, 8, 128>}, {transform_indices = @transform_1, window_bounds = array<i64: 2, 8, 8>}, {transform_indices = @transform_2, window_bounds = array<i64: 2, 8, 1>}, {pipeline_mode = #tpu.pipeline_mode<synchronous>, transform_indices = @transform_3, window_bounds = array<i64: 128, 384>}, {pipeline_mode = #tpu.pipeline_mode<synchronous>, transform_indices = @transform_4, window_bounds = array<i64: 128, 128>}, {pipeline_mode = #tpu.pipeline_mode<synchronous>, transform_indices = @transform_5, window_bounds = array<i64: 8, 128>}, {transform_indices = @transform_6, window_bounds = array<i64: 2, 8, 128>}]} {
    %c0 = arith.constant 0 : index
    %c0_0 = arith.constant 0 : index
    %c0_1 = arith.constant 0 : index
    %0 = vector.load %arg1[%c0, %c0_0, %c0_1] : memref<2x8x128xf32, #tpu.memory_space<vmem>>, vector<2x8x128xf32>
    %1 = vector.shape_cast %0 : vector<2x8x128xf32> to vector<16x128xf32>
    %c0_2 = arith.constant 0 : index
    %c0_3 = arith.constant 0 : index
    %2 = vector.load %arg6[%c0_2, %c0_3] : memref<8x128xf32, #tpu.memory_space<vmem>>, vector<8x128xf32>
    %3 = vector.extract_strided_slice %2 {offsets = [0, 0], sizes = [1, 128], strides = [1, 1]} : vector<8x128xf32> to vector<1x128xf32>
    %4 = vector.extract_strided_slice %2 {offsets = [1, 0], sizes = [1, 128], strides = [1, 1]} : vector<8x128xf32> to vector<1x128xf32>
    %5 = vector.extract_strided_slice %2 {offsets = [2, 0], sizes = [1, 128], strides = [1, 1]} : vector<8x128xf32> to vector<1x128xf32>
    %6 = vector.extract_strided_slice %2 {offsets = [3, 0], sizes = [1, 128], strides = [1, 1]} : vector<8x128xf32> to vector<1x128xf32>
    %7 = vector.extract_strided_slice %2 {offsets = [4, 0], sizes = [1, 128], strides = [1, 1]} : vector<8x128xf32> to vector<1x128xf32>
    %8 = vector.extract_strided_slice %2 {offsets = [5, 0], sizes = [1, 128], strides = [1, 1]} : vector<8x128xf32> to vector<1x128xf32>
    %cst = arith.constant dense<0.000000e+00> : vector<16xf32>
    %9 = vector.multi_reduction <add>, %1, %cst [1] : vector<16x128xf32> to vector<16xf32>
    %10 = vector.shape_cast %9 : vector<16xf32> to vector<16x1xf32>
    %cst_4 = arith.constant 1.280000e+02 : f32
    %11 = vector.broadcast %cst_4 : f32 to vector<16x1xf32>
    %12 = arith.divf %10, %11 : vector<16x1xf32>
    %13 = vector.broadcast %12 : vector<16x1xf32> to vector<16x128xf32>
    %14 = arith.subf %1, %13 : vector<16x128xf32>
    %15 = arith.mulf %14, %14 : vector<16x128xf32>
    %cst_5 = arith.constant dense<0.000000e+00> : vector<16xf32>
    %16 = vector.multi_reduction <add>, %15, %cst_5 [1] : vector<16x128xf32> to vector<16xf32>
    %17 = vector.shape_cast %16 : vector<16xf32> to vector<16x1xf32>
    %cst_6 = arith.constant 1.280000e+02 : f32
    %18 = vector.broadcast %cst_6 : f32 to vector<16x1xf32>
    %19 = arith.divf %17, %18 : vector<16x1xf32>
    %cst_7 = arith.constant 9.99999974E-6 : f32
    %20 = vector.broadcast %cst_7 : f32 to vector<16x1xf32>
    %21 = arith.addf %19, %20 : vector<16x1xf32>
    %22 = math.rsqrt %21 : vector<16x1xf32>
    %23 = vector.broadcast %22 : vector<16x1xf32> to vector<16x128xf32>
    %24 = arith.mulf %14, %23 : vector<16x128xf32>
    %25 = vector.broadcast %3 : vector<1x128xf32> to vector<16x128xf32>
    %26 = arith.mulf %24, %25 : vector<16x128xf32>
    %27 = vector.broadcast %4 : vector<1x128xf32> to vector<16x128xf32>
    %28 = arith.addf %26, %27 : vector<16x128xf32>
    %c0_8 = arith.constant 0 : index
    %c0_9 = arith.constant 0 : index
    %c0_10 = arith.constant 0 : index
    %29 = vector.load %arg2[%c0_8, %c0_9, %c0_10] : memref<2x8x8xbf16, #tpu.memory_space<vmem>>, vector<2x8x8xbf16>
    %30 = vector.shape_cast %28 : vector<16x128xf32> to vector<2x8x128xf32>
    %31 = arith.truncf %30 : vector<2x8x128xf32> to vector<2x8x128xbf16>
    "tpu.trace_start"() <{level = 10 : i32, message = "bij,bjd->bid"}> : () -> ()
    %cst_11 = arith.constant dense<0.000000e+00> : vector<2x8x128xf32>
    %32 = tpu.matmul %29, %31, %cst_11 {dimension_numbers = #tpu.dot_dimension_numbers<[2], [1], [1], [2], [0, 0, 0, 1, 1, 2], [0], [0]>} : vector<2x8x8xbf16>, vector<2x8x128xbf16>, vector<2x8x128xf32> -> vector<2x8x128xf32>
    "tpu.trace_stop"() : () -> ()
    %c0_12 = arith.constant 0 : index
    %c0_13 = arith.constant 0 : index
    %c0_14 = arith.constant 0 : index
    %33 = vector.load %arg3[%c0_12, %c0_13, %c0_14] : memref<2x8x1xf32, #tpu.memory_space<vmem>>, vector<2x8x1xf32>
    %34 = vector.broadcast %33 : vector<2x8x1xf32> to vector<2x8x128xf32>
    %35 = arith.addf %32, %34 : vector<2x8x128xf32>
    %36 = arith.addf %35, %0 : vector<2x8x128xf32>
    %37 = arith.mulf %36, %36 : vector<2x8x128xf32>
    %38 = arith.mulf %36, %37 : vector<2x8x128xf32>
    %cst_15 = arith.constant 4.471500e-02 : f32
    %39 = vector.broadcast %cst_15 : f32 to vector<2x8x128xf32>
    %40 = arith.mulf %39, %38 : vector<2x8x128xf32>
    %41 = arith.addf %36, %40 : vector<2x8x128xf32>
    %cst_16 = arith.constant 0.797884583 : f32
    %42 = vector.broadcast %cst_16 : f32 to vector<2x8x128xf32>
    %43 = arith.mulf %42, %41 : vector<2x8x128xf32>
    %44 = math.tanh %43 : vector<2x8x128xf32>
    %cst_17 = arith.constant 1.000000e+00 : f32
    %45 = vector.broadcast %cst_17 : f32 to vector<2x8x128xf32>
    %46 = arith.addf %45, %44 : vector<2x8x128xf32>
    %cst_18 = arith.constant 5.000000e-01 : f32
    %47 = vector.broadcast %cst_18 : f32 to vector<2x8x128xf32>
    %48 = arith.mulf %47, %46 : vector<2x8x128xf32>
    %49 = arith.mulf %36, %48 : vector<2x8x128xf32>
    %c0_19 = arith.constant 0 : index
    %c0_20 = arith.constant 0 : index
    %50 = vector.load %arg4[%c0_19, %c0_20] : memref<128x384xbf16, #tpu.memory_space<vmem>>, vector<128x384xbf16>
    %51 = arith.truncf %1 : vector<16x128xf32> to vector<16x128xbf16>
    %cst_21 = arith.constant dense<0.000000e+00> : vector<16x384xf32>
    %52 = tpu.matmul %51, %50, %cst_21 {dimension_numbers = #tpu.dot_dimension_numbers<[1], [0], [0], [1], [0, 0, 1, 1], [], []>} : vector<16x128xbf16>, vector<128x384xbf16>, vector<16x384xf32> -> vector<16x384xf32>
    %53 = vector.extract_strided_slice %52 {offsets = [0, 0], sizes = [16, 128], strides = [1, 1]} : vector<16x384xf32> to vector<16x128xf32>
    %54 = vector.broadcast %5 : vector<1x128xf32> to vector<16x128xf32>
    %55 = arith.addf %53, %54 : vector<16x128xf32>
    %56 = vector.extract_strided_slice %52 {offsets = [0, 128], sizes = [16, 128], strides = [1, 1]} : vector<16x384xf32> to vector<16x128xf32>
    %57 = vector.broadcast %6 : vector<1x128xf32> to vector<16x128xf32>
    %58 = arith.addf %56, %57 : vector<16x128xf32>
    %59 = vector.extract_strided_slice %52 {offsets = [0, 256], sizes = [16, 128], strides = [1, 1]} : vector<16x384xf32> to vector<16x128xf32>
    %60 = vector.broadcast %7 : vector<1x128xf32> to vector<16x128xf32>
    %61 = arith.addf %59, %60 : vector<16x128xf32>
    %cst_22 = arith.constant 0.0883883461 : f32
    %62 = vector.broadcast %cst_22 : f32 to vector<16x128xf32>
    %63 = arith.mulf %55, %62 : vector<16x128xf32>
    %64 = vector.shape_cast %63 : vector<16x128xf32> to vector<2x8x128xf32>
    %65 = arith.truncf %64 : vector<2x8x128xf32> to vector<2x8x128xbf16>
    %66 = vector.shape_cast %58 : vector<16x128xf32> to vector<2x8x128xf32>
    %67 = arith.truncf %66 : vector<2x8x128xf32> to vector<2x8x128xbf16>
    "tpu.trace_start"() <{level = 10 : i32, message = "bqd,bkd->bqk"}> : () -> ()
    %cst_23 = arith.constant dense<0.000000e+00> : vector<2x8x8xf32>
    %68 = tpu.matmul %65, %67, %cst_23 {dimension_numbers = #tpu.dot_dimension_numbers<[2], [2], [1], [1], [0, 0, 0, 1, 1, 1], [0], [0]>} : vector<2x8x128xbf16>, vector<2x8x128xbf16>, vector<2x8x8xf32> -> vector<2x8x8xf32>
    "tpu.trace_stop"() : () -> ()
    %cst_24 = arith.constant dense<0xFF800000> : vector<2x8xf32>
    %69 = vector.multi_reduction <maximumf>, %68, %cst_24 [2] : vector<2x8x8xf32> to vector<2x8xf32>
    %70 = vector.shape_cast %69 : vector<2x8xf32> to vector<2x8x1xf32>
    %71 = vector.broadcast %70 : vector<2x8x1xf32> to vector<2x8x8xf32>
    %72 = arith.subf %68, %71 : vector<2x8x8xf32>
    %73 = math.exp %72 : vector<2x8x8xf32>
    %cst_25 = arith.constant dense<0.000000e+00> : vector<2x8xf32>
    %74 = vector.multi_reduction <add>, %73, %cst_25 [2] : vector<2x8x8xf32> to vector<2x8xf32>
    %75 = vector.shape_cast %74 : vector<2x8xf32> to vector<2x8x1xf32>
    %76 = tpu.reciprocal %75 {approx = true} : vector<2x8x1xf32> -> vector<2x8x1xf32>
    %77 = vector.broadcast %76 : vector<2x8x1xf32> to vector<2x8x8xf32>
    %78 = arith.mulf %73, %77 : vector<2x8x8xf32>
    %79 = vector.shape_cast %61 : vector<16x128xf32> to vector<2x8x128xf32>
    "tpu.trace_start"() <{level = 10 : i32, message = "bqk,bkd->bqd"}> : () -> ()
    %cst_26 = arith.constant dense<0.000000e+00> : vector<2x8x128xf32>
    %80 = tpu.matmul %78, %79, %cst_26 {dimension_numbers = #tpu.dot_dimension_numbers<[2], [1], [1], [2], [0, 0, 0, 1, 1, 2], [0], [0]>} : vector<2x8x8xf32>, vector<2x8x128xf32>, vector<2x8x128xf32> -> vector<2x8x128xf32>
    "tpu.trace_stop"() : () -> ()
    %81 = vector.shape_cast %80 : vector<2x8x128xf32> to vector<16x128xf32>
    %82 = arith.truncf %81 : vector<16x128xf32> to vector<16x128xbf16>
    %c0_27 = arith.constant 0 : index
    %c0_28 = arith.constant 0 : index
    %83 = vector.load %arg5[%c0_27, %c0_28] : memref<128x128xbf16, #tpu.memory_space<vmem>>, vector<128x128xbf16>
    %cst_29 = arith.constant dense<0.000000e+00> : vector<16x128xf32>
    %84 = tpu.matmul %82, %83, %cst_29 {dimension_numbers = #tpu.dot_dimension_numbers<[1], [0], [0], [1], [0, 0, 1, 1], [], []>} : vector<16x128xbf16>, vector<128x128xbf16>, vector<16x128xf32> -> vector<16x128xf32>
    %85 = vector.broadcast %8 : vector<1x128xf32> to vector<16x128xf32>
    %86 = arith.addf %84, %85 : vector<16x128xf32>
    %87 = vector.shape_cast %86 : vector<16x128xf32> to vector<2x8x128xf32>
    %88 = arith.addf %49, %87 : vector<2x8x128xf32>
    %c0_30 = arith.constant 0 : index
    %c0_31 = arith.constant 0 : index
    %c0_32 = arith.constant 0 : index
    %89 = vector.load %arg7[%c0_30, %c0_31, %c0_32] : memref<2x8x128xf32, #tpu.memory_space<vmem>>, vector<2x8x128xf32>
    tpu.vector_store %arg7[%c0_30, %c0_31, %c0_32], %88 {strides = array<i32>} : memref<2x8x128xf32, #tpu.memory_space<vmem>>, vector<2x8x128xf32>,
    return
  }
  func.func @transform_0(%arg0: i32) -> (i32, i32, i32) {
    %c0_i32 = arith.constant 0 : i32
    %c0_i32_0 = arith.constant 0 : i32
    %c0_i32_1 = arith.constant 0 : i32
    return %arg0, %c0_i32, %c0_i32_0 : i32, i32, i32
  }
  func.func @transform_1(%arg0: i32) -> (i32, i32, i32) {
    %c0_i32 = arith.constant 0 : i32
    %c0_i32_0 = arith.constant 0 : i32
    %c0_i32_1 = arith.constant 0 : i32
    return %arg0, %c0_i32, %c0_i32_0 : i32, i32, i32
  }
  func.func @transform_2(%arg0: i32) -> (i32, i32, i32) {
    %c0_i32 = arith.constant 0 : i32
    %c0_i32_0 = arith.constant 0 : i32
    %c0_i32_1 = arith.constant 0 : i32
    return %arg0, %c0_i32, %c0_i32_0 : i32, i32, i32
  }
  func.func @transform_3(%arg0: i32) -> (i32, i32) {
    %c0_i32 = arith.constant 0 : i32
    %c0_i32_0 = arith.constant 0 : i32
    %c0_i32_1 = arith.constant 0 : i32
    return %c0_i32, %c0_i32_0 : i32, i32
  }
  func.func @transform_4(%arg0: i32) -> (i32, i32) {
    %c0_i32 = arith.constant 0 : i32
    %c0_i32_0 = arith.constant 0 : i32
    %c0_i32_1 = arith.constant 0 : i32
    return %c0_i32, %c0_i32_0 : i32, i32
  }
  func.func @transform_5(%arg0: i32) -> (i32, i32) {
    %c0_i32 = arith.constant 0 : i32
    %c0_i32_0 = arith.constant 0 : i32
    %c0_i32_1 = arith.constant 0 : i32
    return %c0_i32, %c0_i32_0 : i32, i32
  }
  func.func @transform_6(%arg0: i32) -> (i32, i32, i32) {
    %c0_i32 = arith.constant 0 : i32
    %c0_i32_0 = arith.constant 0 : i32
    %c0_i32_1 = arith.constant 0 : i32
    return %arg0, %c0_i32, %c0_i32_0 : i32, i32, i32
  }
}

</mosaic_0001>

<llo_original>
// kernel: tpu_custom_call.1
$region0: #{tpu_custom_call.1}
  #allocation0 [shape = 'u32[]', space=smem, size = 0x4, offset = 0x4, fixed_abs, tag = 'smem constant byte address 0x4 - core index']
  #allocation1 [shape = 'u32[144,128]{1,0:T(1,128)}', space=vmem, size = 0x12000, scoped, tag = 'internal scratch']
  %s0 = inlined_call_operand.vmem [shape: f32[2,8,128], index: 0, kind: input, shape index: {}]
  %s1 = inlined_call_operand.hbm [shape: bf16[2,8,8], index: 1, kind: input, shape index: {}]
  %s2 = inlined_call_operand.vmem [shape: f32[2,8,1], index: 2, kind: input, shape index: {}]
  %s3 = inlined_call_operand.hbm [shape: bf16[128,384], index: 3, kind: input, shape index: {}]
  %s4 = inlined_call_operand.hbm [shape: bf16[128,128], index: 4, kind: input, shape index: {}]
  %s5 = inlined_call_operand.vmem [shape: f32[8,128], index: 5, kind: input, shape index: {}]
  %s6 = inlined_call_operand.hbm [shape: f32[2,8,128], index: 6, kind: output, shape index: {}]
  %s7 = sld [smem:[#allocation0]]
  $region46: #{tpu_custom_call.1} parent=0
    _
  %s9 = ssub.s32 1, %s7
  %s10 = scalar_select 0, %s9, %s7
  $region1: #{tpu_custom_call.1} parent=0
    #allocation2 [shape = 'u8[4096]{0}', space=vmem, size = 0x1000, scoped, tag = 'input window, operand 1, single buffered']
    #allocation3 [shape = 's32[1]{0}', space=sflag, size = 0x4, scoped, tag = 'scoped memory for tpu_custom_call.1']
    #allocation4 [shape = 's32[1]{0}', space=sflag, size = 0x4, scoped, tag = 'scoped memory for tpu_custom_call.1']
    #allocation5 [shape = 'u8[98304]{0}', space=vmem, size = 0x18000, scoped, tag = 'input window, operand 3, single buffered']
    #allocation6 [shape = 's32[1]{0}', space=sflag, size = 0x4, scoped, tag = 'scoped memory for tpu_custom_call.1']
    #allocation7 [shape = 'u8[32768]{0}', space=vmem, size = 0x8000, scoped, tag = 'input window, operand 4, single buffered']
    #allocation8 [shape = 'u8[8192]{0}', space=vmem, size = 0x2000, scoped, tag = 'output window, operand 0, single buffered']
    %11 = vsyncpa [#allocation3], 0
    %12 = vsyncpa [#allocation6], 0
    %13 = vsyncpa [#allocation4], 0
    // Predicated region
    $region2: #{tpu_custom_call.1} parent=1 // pred_check
      _
    $region3: #{tpu_custom_call.1} parent=1 // pred_check_branch
      %15 = sbr.rel (0) target = $region5
    $region4: #{tpu_custom_call.1} parent=1 // pred_region
      _
    $region5: #{tpu_custom_call.1} parent=1 // pred_fallthru
      _
    // Predicated region
    $region6: #{tpu_custom_call.1} parent=1 // pred_check
      _
    $region7: #{tpu_custom_call.1} parent=1 // pred_check_branch
      %17 = sbr.rel (0) target = $region9
    $region8: #{tpu_custom_call.1} parent=1 // pred_region
      %s19 = ssub.s32 128, 128
      %20 = vsyncadd [#allocation3], %s19
      %s21 = sshll.u32 [#allocation2], 4
      %s22 = int_to_ptr.vmem [resolvable:$true] %s21
      %27 = dma.hbm_to_vmem [thread:$0]  %s1, 128, %s22, [#allocation3], 64, 64, 4
    $region9: #{tpu_custom_call.1} parent=1 // pred_fallthru
      _
    // Predicated region
    $region10: #{tpu_custom_call.1} parent=1 // pred_check
      _
    $region11: #{tpu_custom_call.1} parent=1 // pred_check_branch
      %29 = sbr.rel (0) target = $region13
    $region12: #{tpu_custom_call.1} parent=1 // pred_region
      _
    $region13: #{tpu_custom_call.1} parent=1 // pred_fallthru
      _
    // Predicated region
    $region14: #{tpu_custom_call.1} parent=1 // pred_check
      _
    $region15: #{tpu_custom_call.1} parent=1 // pred_check_branch
      %31 = sbr.rel (0) target = $region17
    $region16: #{tpu_custom_call.1} parent=1 // pred_region
      %s33 = ssub.s32 3072, 3072
      %34 = vsyncadd [#allocation6], %s33
      %s35 = sshll.u32 [#allocation5], 4
      %s36 = int_to_ptr.vmem [resolvable:$true] %s35
      %41 = dma.hbm_to_vmem [thread:$0]  %s3, 3072, %s36, [#allocation6], 192, 192, 12
    $region17: #{tpu_custom_call.1} parent=1 // pred_fallthru
      _
    // Predicated region
    $region18: #{tpu_custom_call.1} parent=1 // pred_check
      _
    $region19: #{tpu_custom_call.1} parent=1 // pred_check_branch
      %43 = sbr.rel (0) target = $region21
    $region20: #{tpu_custom_call.1} parent=1 // pred_region
      %s45 = ssub.s32 1024, 1024
      %46 = vsyncadd [#allocation6], %s45
      %s47 = sshll.u32 [#allocation7], 4
      %s48 = int_to_ptr.vmem [resolvable:$true] %s47
      %53 = dma.hbm_to_vmem [thread:$0]  %s4, 1024, %s48, [#allocation6], 64, 64, 4
    $region21: #{tpu_custom_call.1} parent=1 // pred_fallthru
      _
    // Predicated region
    $region22: #{tpu_custom_call.1} parent=1 // pred_check
      _
    $region23: #{tpu_custom_call.1} parent=1 // pred_check_branch
      %55 = sbr.rel (0) target = $region25
    $region24: #{tpu_custom_call.1} parent=1 // pred_region
      _
    $region25: #{tpu_custom_call.1} parent=1 // pred_fallthru
      _
    // Predicated region
    $region26: #{tpu_custom_call.1} parent=1 // pred_check
      _
    $region27: #{tpu_custom_call.1} parent=1 // pred_check_branch
      %57 = sbr.rel (0) target = $region29
    $region28: #{tpu_custom_call.1} parent=1 // pred_region
      %58 = dma.done [#allocation3], 128
    $region29: #{tpu_custom_call.1} parent=1 // pred_fallthru
      _
    // Predicated region
    $region30: #{tpu_custom_call.1} parent=1 // pred_check
      _
    $region31: #{tpu_custom_call.1} parent=1 // pred_check_branch
      %60 = sbr.rel (0) target = $region33
    $region32: #{tpu_custom_call.1} parent=1 // pred_region
      %61 = dma.done [#allocation6], 3072
    $region33: #{tpu_custom_call.1} parent=1 // pred_fallthru
      _
    // Predicated region
    $region34: #{tpu_custom_call.1} parent=1 // pred_check
      _
    $region35: #{tpu_custom_call.1} parent=1 // pred_check_branch
      %63 = sbr.rel (0) target = $region37
    $region36: #{tpu_custom_call.1} parent=1 // pred_region
      %64 = dma.done [#allocation6], 1024
    $region37: #{tpu_custom_call.1} parent=1 // pred_fallthru
      _
    %v66 = vld [vmem:[%s0] sm:$0xff]
    %v67 = vld [vmem:[%s0 + $0x8] sm:$0xff]
    %v68 = vld [vmem:[%s5] sm:$0xff]
    %69 = vadd.xlane.f32.xlu0 %v66
    %v70 = vpop.xlane.xlu0 %69
    %71 = vadd.xlane.f32.xlu0 %v67
    %v72 = vpop.xlane.xlu0 %71
    %v73 = vrcp.pop 128.0
    %v74 = vmul.f32 %v70, %v73
    %v75 = vmul.f32 %v72, %v73
    %v76 = vsub.f32 %v66, %v74
    %v77 = vsub.f32 %v67, %v75
    %v78 = vmul.f32 %v76, %v76
    %v79 = vmul.f32 %v77, %v77
    %80 = vadd.xlane.f32.xlu0 %v78
    %v81 = vpop.xlane.xlu0 %80
    %82 = vadd.xlane.f32.xlu0 %v79
    %v83 = vpop.xlane.xlu0 %82
    %v84 = vmul.f32 %v81, %v73
    %v85 = vmul.f32 %v83, %v73
    %v86 = vadd.f32 %v84, 1e-05
    %v87 = vadd.f32 %v85, 1e-05
    %v88 = vrsqrt.pop %v86
    %v89 = vrsqrt.pop %v87
    %v90 = vmul.f32 %v76, %v88
    %v91 = vmul.f32 %v77, %v89
    %v92 = vlaneseq
    %v93 = vshrl.u32 %v92, 7
    %v94 = vsub.s32 0, %v93
    %v95 = vrot.slane %v68, %v94
    %v96 = vmul.f32 %v90, %v95
    %v97 = vmul.f32 %v91, %v95
    %v98 = vlaneseq
    %v99 = vshrl.u32 %v98, 7
    %v100 = vsub.s32 1, %v99
    %v101 = vrot.slane %v68, %v100
    %v102 = vadd.f32 %v96, %v101
    %v103 = vadd.f32 %v97, %v101
    %v104 = vld [vmem:[#allocation2] sm:$0xf]
    %v105 = vld [vmem:[#allocation2 + $0x4] sm:$0xf]
    %v106 = vpack.c.bf16 %v102, %v102
    %v107 = vpack.c.bf16 %v103, %v103
    %v108 = vld [vmem:[%s2] sm:$0xff]
    %v109 = vld [vmem:[%s2 + $0x8] sm:$0xff]
    %111 = vset.pattern.permute.xlu0 0
    %112 = vperm.xlu0 %111, %v108
    %v113 = vpop.permute.xlu0 %112
    %116 = vset.pattern.permute.xlu0 0
    %117 = vperm.xlu0 %116, %v109
    %v118 = vpop.permute.xlu0 %117
    %vm120 = vcmask 64512
    %v122 = vsel %vm120, %v104, 0
    %vm124 = vcmask 1043456
    %v126 = vsel %vm124, %v106, 0
    %128 = vmatprep.subr.bf16.mxu0 0
    %129 = vmatpush1.bf16.msra.mxu0 %v126
    %130 = vmatprep.subr.bf16.mxu0 0
    %131 = vmatpush1.bf16.msra.mxu0 0
    %132 = vmatprep.subr.bf16.mxu0 0
    %133 = vmatpush1.bf16.msra.mxu0 0
    %134 = vmatprep.subr.bf16.mxu0 0
    %135 = vmatpush1.bf16.msra.mxu0 0
    %136 = vmatprep.subr.bf16.mxu0 0
    %137 = vmatpush1.bf16.msra.mxu0 0
    %138 = vmatprep.subr.bf16.mxu0 0
    %139 = vmatpush1.bf16.msra.mxu0 0
    %140 = vmatprep.subr.bf16.mxu0 0
    %141 = vmatpush1.bf16.msra.mxu0 0
    %142 = vmatprep.subr.bf16.mxu0 0
    %143 = vmatpush1.bf16.msra.mxu0 0
    %144 = vmatprep.subr.bf16.mxu0 0
    %145 = vmatpush1.bf16.msra.mxu0 0
    %146 = vmatprep.subr.bf16.mxu0 0
    %147 = vmatpush1.bf16.msra.mxu0 0
    %148 = vmatprep.subr.bf16.mxu0 0
    %149 = vmatpush1.bf16.msra.mxu0 0
    %150 = vmatprep.subr.bf16.mxu0 0
    %151 = vmatpush1.bf16.msra.mxu0 0
    %152 = vmatprep.subr.bf16.mxu0 0
    %153 = vmatpush1.bf16.msra.mxu0 0
    %154 = vmatprep.subr.bf16.mxu0 0
    %155 = vmatpush1.bf16.msra.mxu0 0
    %156 = vmatprep.subr.bf16.mxu0 0
    %157 = vmatpush1.bf16.msra.mxu0 0
    %158 = vmatprep.subr.bf16.mxu0 0
    %159 = vmatpush1.bf16.msra.mxu0 0
    %160 = vmatprep.mubr.bf16.mxu0 0
    %161 = vmatmul.mubr.bf16.gmra.mrb[0].mxu0 %v122
    %v162 = vpop.f32.mrb[0].mxu0
    %v163 = vadd.f32 %v113, %v162
    %v164 = vpop.f32.mrb[0].mxu0
    %v165 = vpop.f32.mrb[0].mxu0
    %v166 = vpop.f32.mrb[0].mxu0
    %167 = vdwg.mxu0
    %v169 = vsel %vm120, %v105, 0
    %v172 = vsel %vm124, %v107, 0
    %174 = vmatprep.subr.bf16.mxu0 0
    %175 = vmatpush1.bf16.msra.mxu0 %v172
    %176 = vmatprep.subr.bf16.mxu0 0
    %177 = vmatpush1.bf16.msra.mxu0 0
    %178 = vmatprep.subr.bf16.mxu0 0
    %179 = vmatpush1.bf16.msra.mxu0 0
    %180 = vmatprep.subr.bf16.mxu0 0
    %181 = vmatpush1.bf16.msra.mxu0 0
    %182 = vmatprep.subr.bf16.mxu0 0
    %183 = vmatpush1.bf16.msra.mxu0 0
    %184 = vmatprep.subr.bf16.mxu0 0
    %185 = vmatpush1.bf16.msra.mxu0 0
    %186 = vmatprep.subr.bf16.mxu0 0
    %187 = vmatpush1.bf16.msra.mxu0 0
    %188 = vmatprep.subr.bf16.mxu0 0
    %189 = vmatpush1.bf16.msra.mxu0 0
    %190 = vmatprep.subr.bf16.mxu0 0
    %191 = vmatpush1.bf16.msra.mxu0 0
    %192 = vmatprep.subr.bf16.mxu0 0
    %193 = vmatpush1.bf16.msra.mxu0 0
    %194 = vmatprep.subr.bf16.mxu0 0
    %195 = vmatpush1.bf16.msra.mxu0 0
    %196 = vmatprep.subr.bf16.mxu0 0
    %197 = vmatpush1.bf16.msra.mxu0 0
    %198 = vmatprep.subr.bf16.mxu0 0
    %199 = vmatpush1.bf16.msra.mxu0 0
    %200 = vmatprep.subr.bf16.mxu0 0
    %201 = vmatpush1.bf16.msra.mxu0 0
    %202 = vmatprep.subr.bf16.mxu0 0
    %203 = vmatpush1.bf16.msra.mxu0 0
    %204 = vmatprep.subr.bf16.mxu0 0
    %205 = vmatpush1.bf16.msra.mxu0 0
    %206 = vmatprep.mubr.bf16.mxu0 0
    %207 = vmatmul.mubr.bf16.gmra.mrb[0].mxu0 %v169
    %v208 = vpop.f32.mrb[0].mxu0
    %v209 = vadd.f32 %v118, %v208
    %v210 = vpop.f32.mrb[0].mxu0
    %v211 = vpop.f32.mrb[0].mxu0
    %v212 = vpop.f32.mrb[0].mxu0
    %213 = vdwg.mxu0
    %v214 = vadd.f32 %v163, %v66
    %v215 = vadd.f32 %v209, %v67
    %v216 = vmul.f32 %v214, %v214
    %v217 = vmul.f32 %v215, %v215
    %v218 = vmul.f32 %v214, %v216
    %v219 = vmul.f32 %v215, %v217
    %v220 = vmul.f32 %v218, 0.044715
    %v221 = vmul.f32 %v219, 0.044715
    %v222 = vadd.f32 %v214, %v220
    %v223 = vadd.f32 %v215, %v221
    %v224 = vmul.f32 %v222, 0.7978846
    %v225 = vmul.f32 %v223, 0.7978846
    %v226 = vtanh.pop %v224
    %v227 = vtanh.pop %v225
    %v228 = vadd.f32 %v226, 1.0
    %v229 = vadd.f32 %v227, 1.0
    %v230 = vmul.f32 %v228, 0.5
    %v231 = vmul.f32 %v229, 0.5
    %v232 = vmul.f32 %v214, %v230
    %v233 = vmul.f32 %v215, %v231
    %v234 = vld [vmem:[#allocation5] sm:$0xff]
    %v235 = vld [vmem:[#allocation5 + $0x8] sm:$0xf]
    %v236 = vld [vmem:[#allocation5 + $0xc] sm:$0xff]
    %v237 = vld [vmem:[#allocation5 + $0x14] sm:$0xf]
    %v238 = vld [vmem:[#allocation5 + $0x18] sm:$0xff]
    %v239 = vld [vmem:[#allocation5 + $0x20] sm:$0xf]
    %v240 = vld [vmem:[#allocation5 + $0x24] sm:$0xff]
    %v241 = vld [vmem:[#allocation5 + $0x2c] sm:$0xf]
    %v242 = vld [vmem:[#allocation5 + $0x30] sm:$0xff]
    %v243 = vld [vmem:[#allocation5 + $0x38] sm:$0xf]
    %v244 = vld [vmem:[#allocation5 + $0x3c] sm:$0xff]
    %v245 = vld [vmem:[#allocation5 + $0x44] sm:$0xf]
    %v246 = vld [vmem:[#allocation5 + $0x48] sm:$0xff]
    %v247 = vld [vmem:[#allocation5 + $0x50] sm:$0xf]
    %v248 = vld [vmem:[#allocation5 + $0x54] sm:$0xff]
    %v249 = vld [vmem:[#allocation5 + $0x5c] sm:$0xf]
    %v250 = vld [vmem:[#allocation5 + $0x60] sm:$0xff]
    %v251 = vld [vmem:[#allocation5 + $0x68] sm:$0xf]
    %v252 = vld [vmem:[#allocation5 + $0x6c] sm:$0xff]
    %v253 = vld [vmem:[#allocation5 + $0x74] sm:$0xf]
    %v254 = vld [vmem:[#allocation5 + $0x78] sm:$0xff]
    %v255 = vld [vmem:[#allocation5 + $0x80] sm:$0xf]
    %v256 = vld [vmem:[#allocation5 + $0x84] sm:$0xff]
    %v257 = vld [vmem:[#allocation5 + $0x8c] sm:$0xf]
    %v258 = vld [vmem:[#allocation5 + $0x90] sm:$0xff]
    %v259 = vld [vmem:[#allocation5 + $0x98] sm:$0xf]
    %v260 = vld [vmem:[#allocation5 + $0x9c] sm:$0xff]
    %v261 = vld [vmem:[#allocation5 + $0xa4] sm:$0xf]
    %v262 = vld [vmem:[#allocation5 + $0xa8] sm:$0xff]
    %v263 = vld [vmem:[#allocation5 + $0xb0] sm:$0xf]
    %v264 = vld [vmem:[#allocation5 + $0xb4] sm:$0xff]
    %v265 = vld [vmem:[#allocation5 + $0xbc] sm:$0xf]
    %v266 = vpack.c.bf16 %v67, %v66
    %v299 = vunpack.c.l.b16 %v234
    %v300 = vunpack.c.h.b16 %v234
    %v301 = vunpack.c.l.b16 %v235
    %v302 = vunpack.c.l.b16 %v236
    %v303 = vunpack.c.h.b16 %v236
    %v304 = vunpack.c.l.b16 %v237
    %v305 = vunpack.c.l.b16 %v238
    %v306 = vunpack.c.h.b16 %v238
    %v307 = vunpack.c.l.b16 %v239
    %v308 = vunpack.c.l.b16 %v240
    %v309 = vunpack.c.h.b16 %v240
    %v310 = vunpack.c.l.b16 %v241
    %v311 = vunpack.c.l.b16 %v242
    %v312 = vunpack.c.h.b16 %v242
    %v313 = vunpack.c.l.b16 %v243
    %v314 = vunpack.c.l.b16 %v244
    %v315 = vunpack.c.h.b16 %v244
    %v316 = vunpack.c.l.b16 %v245
    %v317 = vunpack.c.l.b16 %v246
    %v318 = vunpack.c.h.b16 %v246
    %v319 = vunpack.c.l.b16 %v247
    %v320 = vunpack.c.l.b16 %v248
    %v321 = vunpack.c.h.b16 %v248
    %v322 = vunpack.c.l.b16 %v249
    %v323 = vunpack.c.l.b16 %v250
    %v324 = vunpack.c.h.b16 %v250
    %v325 = vunpack.c.l.b16 %v251
    %v326 = vunpack.c.l.b16 %v252
    %v327 = vunpack.c.h.b16 %v252
    %v328 = vunpack.c.l.b16 %v253
    %v329 = vunpack.c.l.b16 %v254
    %v330 = vunpack.c.h.b16 %v254
    %v331 = vunpack.c.l.b16 %v255
    %v332 = vunpack.c.l.b16 %v256
    %v333 = vunpack.c.h.b16 %v256
    %v334 = vunpack.c.l.b16 %v257
    %v335 = vunpack.c.l.b16 %v258
    %v336 = vunpack.c.h.b16 %v258
    %v337 = vunpack.c.l.b16 %v259
    %v338 = vunpack.c.l.b16 %v260
    %v339 = vunpack.c.h.b16 %v260
    %v340 = vunpack.c.l.b16 %v261
    %v341 = vunpack.c.l.b16 %v262
    %v342 = vunpack.c.h.b16 %v262
    %v343 = vunpack.c.l.b16 %v263
    %v344 = vunpack.c.l.b16 %v264
    %v345 = vunpack.c.h.b16 %v264
    %v346 = vunpack.c.l.b16 %v265
    %v347 = vpack.c.b16 %v302, %v299
    %v348 = vpack.c.b16 %v303, %v300
    %v349 = vpack.c.b16 %v304, %v301
    %v350 = vpack.c.b16 %v308, %v305
    %v351 = vpack.c.b16 %v309, %v306
    %v352 = vpack.c.b16 %v310, %v307
    %v353 = vpack.c.b16 %v314, %v311
    %v354 = vpack.c.b16 %v315, %v312
    %v355 = vpack.c.b16 %v316, %v313
    %v356 = vpack.c.b16 %v320, %v317
    %v357 = vpack.c.b16 %v321, %v318
    %v358 = vpack.c.b16 %v322, %v319
    %v359 = vpack.c.b16 %v326, %v323
    %v360 = vpack.c.b16 %v327, %v324
    %v361 = vpack.c.b16 %v328, %v325
    %v362 = vpack.c.b16 %v332, %v329
    %v363 = vpack.c.b16 %v333, %v330
    %v364 = vpack.c.b16 %v334, %v331
    %v365 = vpack.c.b16 %v338, %v335
    %v366 = vpack.c.b16 %v339, %v336
    %v367 = vpack.c.b16 %v340, %v337
    %v368 = vpack.c.b16 %v344, %v341
    %v369 = vpack.c.b16 %v345, %v342
    %v370 = vpack.c.b16 %v346, %v343
    %395 = vmatprep.subr.bf16.mxu0 %v348
    %396 = vmatpush1.bf16.msra.mxu0 %v347
    %397 = vmatprep.subr.bf16.mxu0 %v351
    %398 = vmatpush1.bf16.msra.mxu0 %v350
    %399 = vmatprep.subr.bf16.mxu0 %v354
    %400 = vmatpush1.bf16.msra.mxu0 %v353
    %401 = vmatprep.subr.bf16.mxu0 %v357
    %402 = vmatpush1.bf16.msra.mxu0 %v356
    %403 = vmatprep.subr.bf16.mxu0 %v360
    %404 = vmatpush1.bf16.msra.mxu0 %v359
    %405 = vmatprep.subr.bf16.mxu0 %v363
    %406 = vmatpush1.bf16.msra.mxu0 %v362
    %407 = vmatprep.subr.bf16.mxu0 %v366
    %408 = vmatpush1.bf16.msra.mxu0 %v365
    %409 = vmatprep.subr.bf16.mxu0 %v369
    %410 = vmatpush1.bf16.msra.mxu0 %v368
    %411 = vmatprep.subr.bf16.mxu0 0
    %412 = vmatpush1.bf16.msra.mxu0 0
    %413 = vmatprep.subr.bf16.mxu0 0
    %414 = vmatpush1.bf16.msra.mxu0 0
    %415 = vmatprep.subr.bf16.mxu0 0
    %416 = vmatpush1.bf16.msra.mxu0 0
    %417 = vmatprep.subr.bf16.mxu0 0
    %418 = vmatpush1.bf16.msra.mxu0 0
    %419 = vmatprep.subr.bf16.mxu0 0
    %420 = vmatpush1.bf16.msra.mxu0 0
    %421 = vmatprep.subr.bf16.mxu0 0
    %422 = vmatpush1.bf16.msra.mxu0 0
    %423 = vmatprep.subr.bf16.mxu0 0
    %424 = vmatpush1.bf16.msra.mxu0 0
    %425 = vmatprep.subr.bf16.mxu0 0
    %426 = vmatpush1.bf16.msra.mxu0 0
    %427 = vmatprep.mubr.bf16.mxu0 0
    %428 = vmatmul.mubr.bf16.gmra.mrb[0].mxu0 %v266
    %v429 = vpop.f32.mrb[0].mxu0
    %v430 = vadd.f32 0.0, %v429
    %v431 = vpop.f32.mrb[0].mxu0
    %v432 = vadd.f32 0.0, %v431
    %v433 = vpop.f32.mrb[0].mxu0
    %v434 = vadd.f32 0.0, %v433
    %v435 = vpop.f32.mrb[0].mxu0
    %v436 = vadd.f32 0.0, %v435
    %437 = vdwg.mxu0
    %438 = vmatprep.subr.bf16.mxu0 0
    %439 = vmatpush1.bf16.msra.mxu0 %v349
    %440 = vmatprep.subr.bf16.mxu0 0
    %441 = vmatpush1.bf16.msra.mxu0 %v352
    %442 = vmatprep.subr.bf16.mxu0 0
    %443 = vmatpush1.bf16.msra.mxu0 %v355
    %444 = vmatprep.subr.bf16.mxu0 0
    %445 = vmatpush1.bf16.msra.mxu0 %v358
    %446 = vmatprep.subr.bf16.mxu0 0
    %447 = vmatpush1.bf16.msra.mxu0 %v361
    %448 = vmatprep.subr.bf16.mxu0 0
    %449 = vmatpush1.bf16.msra.mxu0 %v364
    %450 = vmatprep.subr.bf16.mxu0 0
    %451 = vmatpush1.bf16.msra.mxu0 %v367
    %452 = vmatprep.subr.bf16.mxu0 0
    %453 = vmatpush1.bf16.msra.mxu0 %v370
    %454 = vmatprep.subr.bf16.mxu0 0
    %455 = vmatpush1.bf16.msra.mxu0 0
    %456 = vmatprep.subr.bf16.mxu0 0
    %457 = vmatpush1.bf16.msra.mxu0 0
    %458 = vmatprep.subr.bf16.mxu0 0
    %459 = vmatpush1.bf16.msra.mxu0 0
    %460 = vmatprep.subr.bf16.mxu0 0
    %461 = vmatpush1.bf16.msra.mxu0 0
    %462 = vmatprep.subr.bf16.mxu0 0
    %463 = vmatpush1.bf16.msra.mxu0 0
    %464 = vmatprep.subr.bf16.mxu0 0
    %465 = vmatpush1.bf16.msra.mxu0 0
    %466 = vmatprep.subr.bf16.mxu0 0
    %467 = vmatpush1.bf16.msra.mxu0 0
    %468 = vmatprep.subr.bf16.mxu0 0
    %469 = vmatpush1.bf16.msra.mxu0 0
    %470 = vmatprep.mubr.bf16.mxu0 0
    %471 = vmatmul.mubr.bf16.gmra.mrb[0].mxu0 %v266
    %v472 = vpop.f32.mrb[0].mxu0
    %v473 = vadd.f32 0.0, %v472
    %v474 = vpop.f32.mrb[0].mxu0
    %v475 = vpop.f32.mrb[0].mxu0
    %v476 = vadd.f32 0.0, %v475
    %v477 = vpop.f32.mrb[0].mxu0
    %478 = vdwg.mxu0
    %v479 = vlaneseq
    %v480 = vshrl.u32 %v479, 7
    %v481 = vsub.s32 2, %v480
    %v482 = vrot.slane %v68, %v481
    %v483 = vadd.f32 %v430, %v482
    %v484 = vadd.f32 %v434, %v482
    %v485 = vlaneseq
    %v486 = vshrl.u32 %v485, 7
    %v487 = vsub.s32 3, %v486
    %v488 = vrot.slane %v68, %v487
    %v489 = vadd.f32 %v432, %v488
    %v490 = vadd.f32 %v436, %v488
    %v491 = vlaneseq
    %v492 = vshrl.u32 %v491, 7
    %v493 = vsub.s32 4, %v492
    %v494 = vrot.slane %v68, %v493
    %v495 = vadd.f32 %v473, %v494
    %v496 = vadd.f32 %v476, %v494
    %v497 = vmul.f32 %v483, 0.088388346
    %v498 = vmul.f32 %v484, 0.088388346
    %v499 = vpack.c.bf16 %v497, %v497
    %v500 = vpack.c.bf16 %v498, %v498
    %v501 = vpack.c.bf16 %v489, %v489
    %v502 = vpack.c.bf16 %v490, %v490
    %503 = vmatprep.subr.bf16.mxu0 0
    %504 = vmatpush1.bf16.xpose.msra.mxu0 %v501
    %505 = vmatprep.subr.bf16.mxu0 0
    %506 = vmatpush1.bf16.xpose.msra.mxu0 0
    %507 = vmatprep.subr.bf16.mxu0 0
    %508 = vmatpush1.bf16.xpose.msra.mxu0 0
    %509 = vmatprep.subr.bf16.mxu0 0
    %510 = vmatpush1.bf16.xpose.msra.mxu0 0
    %511 = vmatprep.subr.bf16.mxu0 0
    %512 = vmatpush1.bf16.xpose.msra.mxu0 0
    %513 = vmatprep.subr.bf16.mxu0 0
    %514 = vmatpush1.bf16.xpose.msra.mxu0 0
    %515 = vmatprep.subr.bf16.mxu0 0
    %516 = vmatpush1.bf16.xpose.msra.mxu0 0
    %517 = vmatprep.subr.bf16.mxu0 0
    %518 = vmatpush1.bf16.xpose.msra.mxu0 0
    %519 = vmatprep.subr.bf16.mxu0 0
    %520 = vmatpush1.bf16.xpose.msra.mxu0 0
    %521 = vmatprep.subr.bf16.mxu0 0
    %522 = vmatpush1.bf16.xpose.msra.mxu0 0
    %523 = vmatprep.subr.bf16.mxu0 0
    %524 = vmatpush1.bf16.xpose.msra.mxu0 0
    %525 = vmatprep.subr.bf16.mxu0 0
    %526 = vmatpush1.bf16.xpose.msra.mxu0 0
    %527 = vmatprep.subr.bf16.mxu0 0
    %528 = vmatpush1.bf16.xpose.msra.mxu0 0
    %529 = vmatprep.subr.bf16.mxu0 0
    %530 = vmatpush1.bf16.xpose.msra.mxu0 0
    %531 = vmatprep.subr.bf16.mxu0 0
    %532 = vmatpush1.bf16.xpose.msra.mxu0 0
    %533 = vmatprep.subr.bf16.mxu0 0
    %534 = vmatpush1.bf16.xpose.msra.mxu0 0
    %535 = vmatprep.mubr.bf16.mxu0 0
    %536 = vmatmul.mubr.bf16.gmra.mrb[0].mxu0 %v499
    %v537 = vpop.f32.mrb[0].mxu0
    %v538 = vadd.f32 0.0, %v537
    %v539 = vpop.f32.mrb[0].mxu0
    %v540 = vpop.f32.mrb[0].mxu0
    %v541 = vpop.f32.mrb[0].mxu0
    %542 = vdwg.mxu0
    %543 = vmatprep.subr.bf16.mxu0 0
    %544 = vmatpush1.bf16.xpose.msra.mxu0 %v502
    %545 = vmatprep.subr.bf16.mxu0 0
    %546 = vmatpush1.bf16.xpose.msra.mxu0 0
    %547 = vmatprep.subr.bf16.mxu0 0
    %548 = vmatpush1.bf16.xpose.msra.mxu0 0
    %549 = vmatprep.subr.bf16.mxu0 0
    %550 = vmatpush1.bf16.xpose.msra.mxu0 0
    %551 = vmatprep.subr.bf16.mxu0 0
    %552 = vmatpush1.bf16.xpose.msra.mxu0 0
    %553 = vmatprep.subr.bf16.mxu0 0
    %554 = vmatpush1.bf16.xpose.msra.mxu0 0
    %555 = vmatprep.subr.bf16.mxu0 0
    %556 = vmatpush1.bf16.xpose.msra.mxu0 0
    %557 = vmatprep.subr.bf16.mxu0 0
    %558 = vmatpush1.bf16.xpose.msra.mxu0 0
    %559 = vmatprep.subr.bf16.mxu0 0
    %560 = vmatpush1.bf16.xpose.msra.mxu0 0
    %561 = vmatprep.subr.bf16.mxu0 0
    %562 = vmatpush1.bf16.xpose.msra.mxu0 0
    %563 = vmatprep.subr.bf16.mxu0 0
    %564 = vmatpush1.bf16.xpose.msra.mxu0 0
    %565 = vmatprep.subr.bf16.mxu0 0
    %566 = vmatpush1.bf16.xpose.msra.mxu0 0
    %567 = vmatprep.subr.bf16.mxu0 0
    %568 = vmatpush1.bf16.xpose.msra.mxu0 0
    %569 = vmatprep.subr.bf16.mxu0 0
    %570 = vmatpush1.bf16.xpose.msra.mxu0 0
    %571 = vmatprep.subr.bf16.mxu0 0
    %572 = vmatpush1.bf16.xpose.msra.mxu0 0
    %573 = vmatprep.subr.bf16.mxu0 0
    %574 = vmatpush1.bf16.xpose.msra.mxu0 0
    %575 = vmatprep.mubr.bf16.mxu0 0
    %576 = vmatmul.mubr.bf16.gmra.mrb[0].mxu0 %v500
    %v577 = vpop.f32.mrb[0].mxu0
    %v578 = vadd.f32 0.0, %v577
    %v579 = vpop.f32.mrb[0].mxu0
    %v580 = vpop.f32.mrb[0].mxu0
    %v581 = vpop.f32.mrb[0].mxu0
    %582 = vdwg.mxu0
    %v583 = vsel %vm120, %v538, -inf
    %584 = vmax.xlane.f32.xlu0 %v583
    %v585 = vpop.xlane.xlu0 %584
    %v586 = vsel %vm120, %v578, -inf
    %587 = vmax.xlane.f32.xlu0 %v586
    %v588 = vpop.xlane.xlu0 %587
    %v589 = vsub.f32 %v538, %v585
    %v590 = vsub.f32 %v578, %v588
    %v591 = vmul.f32 %v589, 1.442695
    %v592 = vpow.pop %v591
    %v593 = vmul.f32 %v590, 1.442695
    %v594 = vpow.pop %v593
    %v595 = vsel %vm120, %v592, 0.0
    %596 = vadd.xlane.f32.xlu0 %v595
    %v597 = vpop.xlane.xlu0 %596
    %v598 = vsel %vm120, %v594, 0.0
    %599 = vadd.xlane.f32.xlu0 %v598
    %v600 = vpop.xlane.xlu0 %599
    %v601 = vrcp.pop %v597
    %v602 = vrcp.pop %v600
    %v603 = vmul.f32 %v592, %v601
    %v604 = vmul.f32 %v594, %v602
    %v606 = vsel %vm120, %v603, 0
    %608 = vmatprep.subr.mxu0 0.0
    %609 = vmatpush1.msra.mxu0 %v495
    %610 = vmatprep.subr.mxu0 0.0
    %611 = vmatpush1.msra.mxu0 0.0
    %612 = vmatprep.subr.mxu0 0.0
    %613 = vmatpush1.msra.mxu0 0.0
    %614 = vmatprep.subr.mxu0 0.0
    %615 = vmatpush1.msra.mxu0 0.0
    %616 = vmatprep.subr.mxu0 0.0
    %617 = vmatpush1.msra.mxu0 0.0
    %618 = vmatprep.subr.mxu0 0.0
    %619 = vmatpush1.msra.mxu0 0.0
    %620 = vmatprep.subr.mxu0 0.0
    %621 = vmatpush1.msra.mxu0 0.0
    %622 = vmatprep.subr.mxu0 0.0
    %623 = vmatpush1.msra.mxu0 0.0
    %624 = vmatprep.subr.mxu0 0.0
    %625 = vmatpush1.msra.mxu0 0.0
    %626 = vmatprep.subr.mxu0 0.0
    %627 = vmatpush1.msra.mxu0 0.0
    %628 = vmatprep.subr.mxu0 0.0
    %629 = vmatpush1.msra.mxu0 0.0
    %630 = vmatprep.subr.mxu0 0.0
    %631 = vmatpush1.msra.mxu0 0.0
    %632 = vmatprep.subr.mxu0 0.0
    %633 = vmatpush1.msra.mxu0 0.0
    %634 = vmatprep.subr.mxu0 0.0
    %635 = vmatpush1.msra.mxu0 0.0
    %636 = vmatprep.subr.mxu0 0.0
    %637 = vmatpush1.msra.mxu0 0.0
    %638 = vmatprep.subr.mxu0 0.0
    %639 = vmatpush1.msra.mxu0 0.0
    %640 = vmatprep.subr.mxu0 0.0
    %641 = vmatpush1.msra.mxu0 0.0
    %642 = vmatprep.subr.mxu0 0.0
    %643 = vmatpush1.msra.mxu0 0.0
    %644 = vmatprep.subr.mxu0 0.0
    %645 = vmatpush1.msra.mxu0 0.0
    %646 = vmatprep.subr.mxu0 0.0
    %647 = vmatpush1.msra.mxu0 0.0
    %648 = vmatprep.subr.mxu0 0.0
    %649 = vmatpush1.msra.mxu0 0.0
    %650 = vmatprep.subr.mxu0 0.0
    %651 = vmatpush1.msra.mxu0 0.0
    %652 = vmatprep.subr.mxu0 0.0
    %653 = vmatpush1.msra.mxu0 0.0
    %654 = vmatprep.subr.mxu0 0.0
    %655 = vmatpush1.msra.mxu0 0.0
    %656 = vmatprep.subr.mxu0 0.0
    %657 = vmatpush1.msra.mxu0 0.0
    %658 = vmatprep.subr.mxu0 0.0
    %659 = vmatpush1.msra.mxu0 0.0
    %660 = vmatprep.subr.mxu0 0.0
    %661 = vmatpush1.msra.mxu0 0.0
    %662 = vmatprep.subr.mxu0 0.0
    %663 = vmatpush1.msra.mxu0 0.0
    %664 = vmatprep.subr.mxu0 0.0
    %665 = vmatpush1.msra.mxu0 0.0
    %666 = vmatprep.subr.mxu0 0.0
    %667 = vmatpush1.msra.mxu0 0.0
    %668 = vmatprep.subr.mxu0 0.0
    %669 = vmatpush1.msra.mxu0 0.0
    %670 = vmatprep.subr.mxu0 0.0
    %671 = vmatpush1.msra.mxu0 0.0
    %672 = vmatprep.mubr.f32.mxu0 0.0
    %673 = vmatmul.mubr.f32.gmra.mrb[0].mxu0 %v606
    %v674 = vpop.f32.mrb[0].mxu0
    %v675 = vadd.f32 0.0, %v674
    %v676 = vpop.f32.mrb[0].mxu0
    %677 = vdwg.mxu0
    %v679 = vsel %vm120, %v604, 0
    %681 = vmatprep.subr.mxu0 0.0
    %682 = vmatpush1.msra.mxu0 %v496
    %683 = vmatprep.subr.mxu0 0.0
    %684 = vmatpush1.msra.mxu0 0.0
    %685 = vmatprep.subr.mxu0 0.0
    %686 = vmatpush1.msra.mxu0 0.0
    %687 = vmatprep.subr.mxu0 0.0
    %688 = vmatpush1.msra.mxu0 0.0
    %689 = vmatprep.subr.mxu0 0.0
    %690 = vmatpush1.msra.mxu0 0.0
    %691 = vmatprep.subr.mxu0 0.0
    %692 = vmatpush1.msra.mxu0 0.0
    %693 = vmatprep.subr.mxu0 0.0
    %694 = vmatpush1.msra.mxu0 0.0
    %695 = vmatprep.subr.mxu0 0.0
    %696 = vmatpush1.msra.mxu0 0.0
    %697 = vmatprep.subr.mxu0 0.0
    %698 = vmatpush1.msra.mxu0 0.0
    %699 = vmatprep.subr.mxu0 0.0
    %700 = vmatpush1.msra.mxu0 0.0
    %701 = vmatprep.subr.mxu0 0.0
    %702 = vmatpush1.msra.mxu0 0.0
    %703 = vmatprep.subr.mxu0 0.0
    %704 = vmatpush1.msra.mxu0 0.0
    %705 = vmatprep.subr.mxu0 0.0
    %706 = vmatpush1.msra.mxu0 0.0
    %707 = vmatprep.subr.mxu0 0.0
    %708 = vmatpush1.msra.mxu0 0.0
    %709 = vmatprep.subr.mxu0 0.0
    %710 = vmatpush1.msra.mxu0 0.0
    %711 = vmatprep.subr.mxu0 0.0
    %712 = vmatpush1.msra.mxu0 0.0
    %713 = vmatprep.subr.mxu0 0.0
    %714 = vmatpush1.msra.mxu0 0.0
    %715 = vmatprep.subr.mxu0 0.0
    %716 = vmatpush1.msra.mxu0 0.0
    %717 = vmatprep.subr.mxu0 0.0
    %718 = vmatpush1.msra.mxu0 0.0
    %719 = vmatprep.subr.mxu0 0.0
    %720 = vmatpush1.msra.mxu0 0.0
    %721 = vmatprep.subr.mxu0 0.0
    %722 = vmatpush1.msra.mxu0 0.0
    %723 = vmatprep.subr.mxu0 0.0
    %724 = vmatpush1.msra.mxu0 0.0
    %725 = vmatprep.subr.mxu0 0.0
    %726 = vmatpush1.msra.mxu0 0.0
    %727 = vmatprep.subr.mxu0 0.0
    %728 = vmatpush1.msra.mxu0 0.0
    %729 = vmatprep.subr.mxu0 0.0
    %730 = vmatpush1.msra.mxu0 0.0
    %731 = vmatprep.subr.mxu0 0.0
    %732 = vmatpush1.msra.mxu0 0.0
    %733 = vmatprep.subr.mxu0 0.0
    %734 = vmatpush1.msra.mxu0 0.0
    %735 = vmatprep.subr.mxu0 0.0
    %736 = vmatpush1.msra.mxu0 0.0
    %737 = vmatprep.subr.mxu0 0.0
    %738 = vmatpush1.msra.mxu0 0.0
    %739 = vmatprep.subr.mxu0 0.0
    %740 = vmatpush1.msra.mxu0 0.0
    %741 = vmatprep.subr.mxu0 0.0
    %742 = vmatpush1.msra.mxu0 0.0
    %743 = vmatprep.subr.mxu0 0.0
    %744 = vmatpush1.msra.mxu0 0.0
    %745 = vmatprep.mubr.f32.mxu0 0.0
    %746 = vmatmul.mubr.f32.gmra.mrb[0].mxu0 %v679
    %v747 = vpop.f32.mrb[0].mxu0
    %v748 = vadd.f32 0.0, %v747
    %v749 = vpop.f32.mrb[0].mxu0
    %750 = vdwg.mxu0
    %v751 = vpack.c.bf16 %v748, %v675
    %v752 = vld [vmem:[#allocation7] sm:$0xf]
    %v753 = vld [vmem:[#allocation7 + $0x4] sm:$0xf]
    %v754 = vld [vmem:[#allocation7 + $0x8] sm:$0xf]
    %v755 = vld [vmem:[#allocation7 + $0xc] sm:$0xf]
    %v756 = vld [vmem:[#allocation7 + $0x10] sm:$0xf]
    %v757 = vld [vmem:[#allocation7 + $0x14] sm:$0xf]
    %v758 = vld [vmem:[#allocation7 + $0x18] sm:$0xf]
    %v759 = vld [vmem:[#allocation7 + $0x1c] sm:$0xf]
    %v760 = vld [vmem:[#allocation7 + $0x20] sm:$0xf]
    %v761 = vld [vmem:[#allocation7 + $0x24] sm:$0xf]
    %v762 = vld [vmem:[#allocation7 + $0x28] sm:$0xf]
    %v763 = vld [vmem:[#allocation7 + $0x2c] sm:$0xf]
    %v764 = vld [vmem:[#allocation7 + $0x30] sm:$0xf]
    %v765 = vld [vmem:[#allocation7 + $0x34] sm:$0xf]
    %v766 = vld [vmem:[#allocation7 + $0x38] sm:$0xf]
    %v767 = vld [vmem:[#allocation7 + $0x3c] sm:$0xf]
    %v768 = vlaneseq
    %v769 = vshrl.u32 %v768, 7
    %v770 = vsub.s32 5, %v769
    %v771 = vrot.slane %v68, %v770
    %v788 = vunpack.c.l.b16 %v752
    %v789 = vunpack.c.l.b16 %v753
    %v790 = vunpack.c.l.b16 %v754
    %v791 = vunpack.c.l.b16 %v755
    %v792 = vunpack.c.l.b16 %v756
    %v793 = vunpack.c.l.b16 %v757
    %v794 = vunpack.c.l.b16 %v758
    %v795 = vunpack.c.l.b16 %v759
    %v796 = vunpack.c.l.b16 %v760
    %v797 = vunpack.c.l.b16 %v761
    %v798 = vunpack.c.l.b16 %v762
    %v799 = vunpack.c.l.b16 %v763
    %v800 = vunpack.c.l.b16 %v764
    %v801 = vunpack.c.l.b16 %v765
    %v802 = vunpack.c.l.b16 %v766
    %v803 = vunpack.c.l.b16 %v767
    %v804 = vpack.c.b16 %v789, %v788
    %v805 = vpack.c.b16 %v791, %v790
    %v806 = vpack.c.b16 %v793, %v792
    %v807 = vpack.c.b16 %v795, %v794
    %v808 = vpack.c.b16 %v797, %v796
    %v809 = vpack.c.b16 %v799, %v798
    %v810 = vpack.c.b16 %v801, %v800
    %v811 = vpack.c.b16 %v803, %v802
    %820 = vmatprep.subr.bf16.mxu0 0
    %821 = vmatpush1.bf16.msra.mxu0 %v804
    %822 = vmatprep.subr.bf16.mxu0 0
    %823 = vmatpush1.bf16.msra.mxu0 %v805
    %824 = vmatprep.subr.bf16.mxu0 0
    %825 = vmatpush1.bf16.msra.mxu0 %v806
    %826 = vmatprep.subr.bf16.mxu0 0
    %827 = vmatpush1.bf16.msra.mxu0 %v807
    %828 = vmatprep.subr.bf16.mxu0 0
    %829 = vmatpush1.bf16.msra.mxu0 %v808
    %830 = vmatprep.subr.bf16.mxu0 0
    %831 = vmatpush1.bf16.msra.mxu0 %v809
    %832 = vmatprep.subr.bf16.mxu0 0
    %833 = vmatpush1.bf16.msra.mxu0 %v810
    %834 = vmatprep.subr.bf16.mxu0 0
    %835 = vmatpush1.bf16.msra.mxu0 %v811
    %836 = vmatprep.subr.bf16.mxu0 0
    %837 = vmatpush1.bf16.msra.mxu0 0
    %838 = vmatprep.subr.bf16.mxu0 0
    %839 = vmatpush1.bf16.msra.mxu0 0
    %840 = vmatprep.subr.bf16.mxu0 0
    %841 = vmatpush1.bf16.msra.mxu0 0
    %842 = vmatprep.subr.bf16.mxu0 0
    %843 = vmatpush1.bf16.msra.mxu0 0
    %844 = vmatprep.subr.bf16.mxu0 0
    %845 = vmatpush1.bf16.msra.mxu0 0
    %846 = vmatprep.subr.bf16.mxu0 0
    %847 = vmatpush1.bf16.msra.mxu0 0
    %848 = vmatprep.subr.bf16.mxu0 0
    %849 = vmatpush1.bf16.msra.mxu0 0
    %850 = vmatprep.subr.bf16.mxu0 0
    %851 = vmatpush1.bf16.msra.mxu0 0
    %852 = vmatprep.mubr.bf16.mxu0 0
    %853 = vmatmul.mubr.bf16.gmra.mrb[0].mxu0 %v751
    %v854 = vpop.f32.mrb[0].mxu0
    %v855 = vadd.f32 %v771, %v854
    %v856 = vpop.f32.mrb[0].mxu0
    %v857 = vpop.f32.mrb[0].mxu0
    %v858 = vadd.f32 %v771, %v857
    %v859 = vpop.f32.mrb[0].mxu0
    %860 = vdwg.mxu0
    %v861 = vadd.f32 %v232, %v855
    %v862 = vadd.f32 %v233, %v858
    %863 = vst [vmem:[#allocation8] sm:$0xff] %v861
    %864 = vst [vmem:[#allocation8 + $0x8] sm:$0xff] %v862
    // Predicated region
    $region38: #{tpu_custom_call.1} parent=1 // pred_check
      _
    $region39: #{tpu_custom_call.1} parent=1 // pred_check_branch
      %866 = sbr.rel (0) target = $region41
    $region40: #{tpu_custom_call.1} parent=1 // pred_region
      %s868 = ssub.s32 256, 256
      %869 = vsyncadd [#allocation4], %s868
      %s870 = sshll.u32 [#allocation8], 4
      %s871 = int_to_ptr.vmem [resolvable:$true] %s870
      %876 = dma.vmem_to_hbm [thread:$0]  %s871, 256, %s6, [#allocation4], 128, 128, 8
    $region41: #{tpu_custom_call.1} parent=1 // pred_fallthru
      _
    // Predicated region
    $region42: #{tpu_custom_call.1} parent=1 // pred_check
      _
    $region43: #{tpu_custom_call.1} parent=1 // pred_check_branch
      %878 = sbr.rel (0) target = $region45
    $region44: #{tpu_custom_call.1} parent=1 // pred_region
      %879 = dma.done [#allocation4], 256
    $region45: #{tpu_custom_call.1} parent=1 // pred_fallthru
      _
    %880 = vsyncpa [#allocation3], 1
    %881 = vsyncpa [#allocation6], 1
    %882 = vsyncpa [#allocation4], 1

</llo_original>
